<compile_context>
chip_gen: v7x
topology: tpu7x:2x2x1
jax: 0.10.0
libtpu: 0.0.40
codegen_flags: <defaults>
</compile_context>

<pallas_src>
import jax
import jax.numpy as jnp
from jax.experimental import pallas as pl
from jax.experimental.pallas import tpu as pltpu

LANE = 128


def _vclv_kernel(q_mu_ref, q_ls_ref, p_mu_ref, p_var_ref, eps_ref,
                 sample_ref, kl_ref):
    mu = q_mu_ref[...]
    log_sigma = q_ls_ref[...]
    sigma = jnp.exp(log_sigma)

    # rsample: mu + sigma * eps  (elementwise hot path)
    sample_ref[...] = (mu + sigma * eps_ref[...]).astype(sample_ref.dtype)

    # KL(Normal(mu, sigma) || Normal(p_mu, p_scale)) elementwise, where
    # p_scale = prior *variance* (faithful to the PyTorch module's quirk).
    p_mu = p_mu_ref[...]
    p_scale = p_var_ref[...]
    inv_p = 1.0 / p_scale
    var_ratio = (sigma * inv_p) ** 2
    t1 = ((mu - p_mu) * inv_p) ** 2
    # log(var_ratio) == 2 * (log_sigma - log(p_scale)); avoids log of an
    # underflowed ratio and reuses the already-loaded q_log_sigma.
    kl_elem = 0.5 * (var_ratio + t1 - 1.0) - (log_sigma - jnp.log(p_scale))

    # Per-tile partial sum, kept lane-shaped; the final (tiny) reduction to a
    # scalar happens outside the kernel so the grid axis stays "parallel".
    partial = jnp.sum(kl_elem, axis=0, keepdims=True)        # (1, LANE)
    kl_ref[...] = partial.reshape(kl_ref.shape)               # (1, 1, LANE)


def _pick_tile_rows(rows, cap=4096):
    """Largest row tile that divides `rows`, respects the (8, 128) rule and
    keeps ~12 double-buffered (tile, 128) f32 buffers comfortably in VMEM."""
    if rows <= cap:
        return rows                      # single full-array block (always legal)
    for t in range(cap, 7, -1):
        if rows % t == 0 and t % 8 == 0:
            return t
    return rows                          # fallback: one big block


def variational_cat_latent_forward(q_mu_1, q_mu_2, q_log_sigma,
                                    prior_loc, prior_var, eps, data_dim,
                                    *, tile_rows=None, vmem_limit_bytes=None):
    """Returns (rsample of q_x, scalar x_kl loss term)."""
    # The module's `q_mu` property: cat along the latent dim.  XLA fuses the
    # lane-dense reshape below into this concat's output.
    q_mu = jnp.concatenate([q_mu_1, q_mu_2], axis=1)
    n, latent_dim = q_mu.shape
    total = n * latent_dim
    assert total % LANE == 0, "n * latent_dim must be a multiple of 128"
    rows = total // LANE

    # Lane-dense flattening: free row-major reshape; kernel sees (rows, 128).
    def flat(a):
        return a.reshape(rows, LANE)

    if tile_rows is None:
        tile_rows = _pick_tile_rows(rows)
    assert rows % tile_rows == 0
    assert tile_rows == rows or tile_rows % 8 == 0
    num_tiles = rows // tile_rows

    row_spec = pl.BlockSpec((tile_rows, LANE), lambda i: (i, 0))
    kl_spec = pl.BlockSpec((1, 1, LANE), lambda i: (i, 0, 0))

    itemsize = 4  # f32 streams
    cost = pl.CostEstimate(
        flops=12 * total,
        transcendentals=3 * total,                       # exp, log, reciprocal
        bytes_accessed=6 * total * itemsize + num_tiles * LANE * itemsize,
    )

    sample_flat, kl_partials = pl.pallas_call(
        _vclv_kernel,
        out_shape=(
            jax.ShapeDtypeStruct((rows, LANE), q_mu.dtype),
            jax.ShapeDtypeStruct((num_tiles, 1, LANE), jnp.float32),
        ),
        grid_spec=pltpu.PrefetchScalarGridSpec(
            num_scalar_prefetch=0,
            grid=(num_tiles,),
            in_specs=[row_spec, row_spec, row_spec, row_spec, row_spec],
            out_specs=(row_spec, kl_spec),
        ),
        compiler_params=pltpu.CompilerParams(
            dimension_semantics=("parallel",),
            vmem_limit_bytes=vmem_limit_bytes),
        cost_estimate=cost,
    )(flat(q_mu), flat(q_log_sigma), flat(prior_loc), flat(prior_var), flat(eps))

    sample = sample_flat.reshape(n, latent_dim)
    # kl_per_latent_dim.sum() / n / data_dim  ==  total_sum / (n * data_dim)
    kl = kl_partials.sum() / (float(n) * float(data_dim))
    return sample, kl


def reference_forward(q_mu_1, q_mu_2, q_log_sigma, prior_loc, prior_var, eps,
                      data_dim):
    """Pure-JAX mirror of the PyTorch forward (torch KL(Normal, Normal) form)."""
    q_mu = jnp.concatenate([q_mu_1, q_mu_2], axis=1)
    sigma = jnp.exp(q_log_sigma)
    sample = q_mu + sigma * eps
    p_scale = prior_var  # same quirk: variance used as scale
    var_ratio = (sigma / p_scale) ** 2
    t1 = ((q_mu - prior_loc) / p_scale) ** 2
    kl_elem = 0.5 * (var_ratio + t1 - 1.0 - jnp.log(var_ratio))
    n = q_mu.shape[0]
    kl = kl_elem.sum(axis=0).sum() / n / data_dim
    return sample, kl


if __name__ == "__main__":
    # Module shapes: n latent points, latent_dim, trainable split, data_dim.
    n = 256
    latent_dim = 8
    trainable_latent_dim = 4
    data_dim = 32

    key = jax.random.PRNGKey(0)
    k_xinit, k_logsig, k_ploc, k_pvar, k_eps = jax.random.split(key, 5)

    # Deterministic "parameter" init mirroring __init__:
    X_init = jax.random.normal(k_xinit, (n, latent_dim), dtype=jnp.float32)
    q_mu_1 = X_init[:, :trainable_latent_dim]        # trainable parameter
    q_mu_2 = X_init[:, trainable_latent_dim:]        # fixed buffer
    q_log_sigma = jax.random.normal(k_logsig, (n, latent_dim), dtype=jnp.float32)

    # prior_x = Normal(loc, scale); the module reads .loc and .variance.
    prior_loc = jax.random.normal(k_ploc, (n, latent_dim), dtype=jnp.float32) * 0.1
    prior_var = 0.5 + jax.random.uniform(k_pvar, (n, latent_dim), dtype=jnp.float32)

    # rsample noise (reparameterization epsilon).
    # TODO(synk): torch's internal rsample RNG has no Pallas equivalent; the
    # noise is taken as an explicit input instead.
    eps = jax.random.normal(k_eps, (n, latent_dim), dtype=jnp.float32)

    # tile_rows=8 forces a multi-step grid at this small demo size so the
    # per-tile partial-KL path is exercised; production sizes use the
    # auto-picked large tile.
    sample, kl = variational_cat_latent_forward(
        q_mu_1, q_mu_2, q_log_sigma, prior_loc, prior_var, eps, data_dim,
        tile_rows=8)
    sample = jax.block_until_ready(sample)
    kl = jax.block_until_ready(kl)

    ref_sample, ref_kl = reference_forward(
        q_mu_1, q_mu_2, q_log_sigma, prior_loc, prior_var, eps, data_dim)

    assert jnp.allclose(sample, ref_sample, atol=1e-5, rtol=1e-5)
    assert jnp.allclose(kl, ref_kl, atol=1e-5, rtol=1e-5)
    print("KERNEL_OK")
</pallas_src>

<mosaic_0001>
module attributes {stable_mosaic.version = 11 : i64} {
  func.func @_vclv_kernel(%arg0: i32, %arg1: memref<8x128xf32, #tpu.memory_space<vmem>>, %arg2: memref<8x128xf32, #tpu.memory_space<vmem>>, %arg3: memref<8x128xf32, #tpu.memory_space<vmem>>, %arg4: memref<8x128xf32, #tpu.memory_space<vmem>>, %arg5: memref<8x128xf32, #tpu.memory_space<vmem>>, %arg6: memref<8x128xf32, #tpu.memory_space<vmem>>, %arg7: memref<1x1x128xf32, #tpu.memory_space<vmem>>) attributes {dimension_semantics = [#tpu.dimension_semantics<parallel>], iteration_bounds = array<i64: 2>, scalar_prefetch = 0 : i64, scratch_operands = 0 : i64, tpu.core_type = #tpu.core_type<tc>, window_params = [{transform_indices = @transform_0, window_bounds = array<i64: 8, 128>}, {transform_indices = @transform_1, window_bounds = array<i64: 8, 128>}, {transform_indices = @transform_2, window_bounds = array<i64: 8, 128>}, {transform_indices = @transform_3, window_bounds = array<i64: 8, 128>}, {transform_indices = @transform_4, window_bounds = array<i64: 8, 128>}, {transform_indices = @transform_5, window_bounds = array<i64: 8, 128>}, {transform_indices = @transform_6, window_bounds = array<i64: 1, 1, 128>}]} {
    %c0 = arith.constant 0 : index
    %c0_0 = arith.constant 0 : index
    %0 = vector.load %arg1[%c0, %c0_0] : memref<8x128xf32, #tpu.memory_space<vmem>>, vector<8x128xf32>
    %c0_1 = arith.constant 0 : index
    %c0_2 = arith.constant 0 : index
    %1 = vector.load %arg2[%c0_1, %c0_2] : memref<8x128xf32, #tpu.memory_space<vmem>>, vector<8x128xf32>
    %2 = math.exp %1 : vector<8x128xf32>
    %c0_3 = arith.constant 0 : index
    %c0_4 = arith.constant 0 : index
    %3 = vector.load %arg5[%c0_3, %c0_4] : memref<8x128xf32, #tpu.memory_space<vmem>>, vector<8x128xf32>
    %4 = arith.mulf %2, %3 : vector<8x128xf32>
    %5 = arith.addf %0, %4 : vector<8x128xf32>
    %c0_5 = arith.constant 0 : index
    %c0_6 = arith.constant 0 : index
    %6 = vector.load %arg6[%c0_5, %c0_6] : memref<8x128xf32, #tpu.memory_space<vmem>>, vector<8x128xf32>
    tpu.vector_store %arg6[%c0_5, %c0_6], %5 {strides = array<i32>} : memref<8x128xf32, #tpu.memory_space<vmem>>, vector<8x128xf32>,
    %c0_7 = arith.constant 0 : index
    %c0_8 = arith.constant 0 : index
    %7 = vector.load %arg3[%c0_7, %c0_8] : memref<8x128xf32, #tpu.memory_space<vmem>>, vector<8x128xf32>
    %c0_9 = arith.constant 0 : index
    %c0_10 = arith.constant 0 : index
    %8 = vector.load %arg4[%c0_9, %c0_10] : memref<8x128xf32, #tpu.memory_space<vmem>>, vector<8x128xf32>
    %cst = arith.constant 1.000000e+00 : f32
    %9 = vector.broadcast %cst : f32 to vector<8x128xf32>
    %10 = arith.divf %9, %8 : vector<8x128xf32>
    %11 = arith.mulf %2, %10 : vector<8x128xf32>
    %12 = arith.mulf %11, %11 : vector<8x128xf32>
    %13 = arith.subf %0, %7 : vector<8x128xf32>
    %14 = arith.mulf %13, %10 : vector<8x128xf32>
    %15 = arith.mulf %14, %14 : vector<8x128xf32>
    %16 = arith.addf %12, %15 : vector<8x128xf32>
    %cst_11 = arith.constant 1.000000e+00 : f32
    %17 = vector.broadcast %cst_11 : f32 to vector<8x128xf32>
    %18 = arith.subf %16, %17 : vector<8x128xf32>
    %cst_12 = arith.constant 5.000000e-01 : f32
    %19 = vector.broadcast %cst_12 : f32 to vector<8x128xf32>
    %20 = arith.mulf %19, %18 : vector<8x128xf32>
    %21 = math.log %8 : vector<8x128xf32>
    %22 = arith.subf %1, %21 : vector<8x128xf32>
    %23 = arith.subf %20, %22 : vector<8x128xf32>
    %cst_13 = arith.constant dense<0.000000e+00> : vector<128xf32>
    %24 = vector.multi_reduction <add>, %23, %cst_13 [0] : vector<8x128xf32> to vector<128xf32>
    %25 = vector.shape_cast %24 : vector<128xf32> to vector<1x128xf32>
    %26 = vector.shape_cast %25 : vector<1x128xf32> to vector<1x1x128xf32>
    %c0_14 = arith.constant 0 : index
    %c0_15 = arith.constant 0 : index
    %c0_16 = arith.constant 0 : index
    %27 = vector.load %arg7[%c0_14, %c0_15, %c0_16] : memref<1x1x128xf32, #tpu.memory_space<vmem>>, vector<1x1x128xf32>
    tpu.vector_store %arg7[%c0_14, %c0_15, %c0_16], %26 {strides = array<i32>} : memref<1x1x128xf32, #tpu.memory_space<vmem>>, vector<1x1x128xf32>,
    return
  }
  func.func @transform_0(%arg0: i32) -> (i32, i32) {
    %c0_i32 = arith.constant 0 : i32
    %c0_i32_0 = arith.constant 0 : i32
    return %arg0, %c0_i32 : i32, i32
  }
  func.func @transform_1(%arg0: i32) -> (i32, i32) {
    %c0_i32 = arith.constant 0 : i32
    %c0_i32_0 = arith.constant 0 : i32
    return %arg0, %c0_i32 : i32, i32
  }
  func.func @transform_2(%arg0: i32) -> (i32, i32) {
    %c0_i32 = arith.constant 0 : i32
    %c0_i32_0 = arith.constant 0 : i32
    return %arg0, %c0_i32 : i32, i32
  }
  func.func @transform_3(%arg0: i32) -> (i32, i32) {
    %c0_i32 = arith.constant 0 : i32
    %c0_i32_0 = arith.constant 0 : i32
    return %arg0, %c0_i32 : i32, i32
  }
  func.func @transform_4(%arg0: i32) -> (i32, i32) {
    %c0_i32 = arith.constant 0 : i32
    %c0_i32_0 = arith.constant 0 : i32
    return %arg0, %c0_i32 : i32, i32
  }
  func.func @transform_5(%arg0: i32) -> (i32, i32) {
    %c0_i32 = arith.constant 0 : i32
    %c0_i32_0 = arith.constant 0 : i32
    return %arg0, %c0_i32 : i32, i32
  }
  func.func @transform_6(%arg0: i32) -> (i32, i32, i32) {
    %c0_i32 = arith.constant 0 : i32
    %c0_i32_0 = arith.constant 0 : i32
    %c0_i32_1 = arith.constant 0 : i32
    return %arg0, %c0_i32, %c0_i32_0 : i32, i32, i32
  }
}

</mosaic_0001>

<llo_original>
// kernel: tpu_custom_call.1
$region0: #{tpu_custom_call.1}
  #allocation0 [shape = 'u32[]', space=smem, size = 0x4, offset = 0x4, fixed_abs, tag = 'smem constant byte address 0x4 - core index']
  #allocation1 [shape = 'u32[144,128]{1,0:T(1,128)}', space=vmem, size = 0x12000, scoped, tag = 'internal scratch']
  %s0 = inlined_call_operand.hbm [shape: f32[16,128], index: 0, kind: input, shape index: {}]
  %s1 = inlined_call_operand.hbm [shape: f32[16,128], index: 1, kind: input, shape index: {}]
  %s2 = inlined_call_operand.hbm [shape: f32[16,128], index: 2, kind: input, shape index: {}]
  %s3 = inlined_call_operand.hbm [shape: f32[16,128], index: 3, kind: input, shape index: {}]
  %s4 = inlined_call_operand.hbm [shape: f32[16,128], index: 4, kind: input, shape index: {}]
  %s5 = inlined_call_operand.hbm [shape: f32[16,128], index: 5, kind: output, shape index: {0}]
  %s6 = inlined_call_operand.hbm [shape: f32[2,1,128], index: 6, kind: output, shape index: {1}]
  %7 = xla_tuple %s5, %s6
  %s8 = sld [smem:[#allocation0]]
  $region81: #{tpu_custom_call.1} parent=0
    _
  %s10 = ssub.s32 1, %s8
  %s11 = scalar_select 0, %s10, %s8
  $region1: #{tpu_custom_call.1} parent=0
    #allocation2 [shape = 'u8[8192]{0}', space=vmem, size = 0x2000, scoped, tag = 'input window, operand 0']
    #allocation3 [shape = 's32[2]{0}', space=sflag, size = 0x8, scoped, tag = 'scoped memory for tpu_custom_call.1']
    #allocation4 [shape = 's32[2]{0}', space=sflag, size = 0x8, scoped, tag = 'scoped memory for tpu_custom_call.1']
    #allocation5 [shape = 'u8[8192]{0}', space=vmem, size = 0x2000, scoped, tag = 'input window, operand 1']
    #allocation6 [shape = 's32[2]{0}', space=sflag, size = 0x8, scoped, tag = 'scoped memory for tpu_custom_call.1']
    #allocation7 [shape = 'u8[8192]{0}', space=vmem, size = 0x2000, scoped, tag = 'input window, operand 2']
    #allocation8 [shape = 'u8[8192]{0}', space=vmem, size = 0x2000, scoped, tag = 'input window, operand 3']
    #allocation9 [shape = 's32[2]{0}', space=sflag, size = 0x8, scoped, tag = 'scoped memory for tpu_custom_call.1']
    #allocation10 [shape = 'u8[8192]{0}', space=vmem, size = 0x2000, scoped, tag = 'input window, operand 4']
    #allocation11 [shape = 'u8[8192]{0}', space=vmem, size = 0x2000, scoped, tag = 'output window, operand 0']
    #allocation12 [shape = 'u8[1024]{0}', space=vmem, size = 0x400, scoped, tag = 'output window, operand 1']
    #allocation13 [shape = 's32[2]{0}', space=sflag, size = 0x8, scoped, tag = 'scoped memory for tpu_custom_call.1']
    %12 = vsyncpa [#allocation3], 0
    %s13 = scalar_lea.sflag [#allocation3], 1
    %14 = vsyncpa %s13, 0
    %15 = vsyncpa [#allocation6], 0
    %s16 = scalar_lea.sflag [#allocation6], 1
    %17 = vsyncpa %s16, 0
    %18 = vsyncpa [#allocation9], 0
    %s19 = scalar_lea.sflag [#allocation9], 1
    %20 = vsyncpa %s19, 0
    %21 = vsyncpa [#allocation4], 0
    %s22 = scalar_lea.sflag [#allocation4], 1
    %23 = vsyncpa %s22, 0
    %24 = vsyncpa [#allocation13], 0
    %s25 = scalar_lea.sflag [#allocation13], 1
    %26 = vsyncpa %s25, 0
    loop: start=0, step=1, limit=4
    $region2: #{tpu_custom_call.1} parent=1 // loop_pre_header
      _
    $region3: #{tpu_custom_call.1} parent=1 // loop_header
      %s28 = sphi 0, %s32
      %p29 = scmp.ge.s32.totalorder %s28, 4
      %s38 = sphi 0, %s40
      %s41 = sphi 0, %s38
      %s42 = sphi 0, %s41
      %s58 = sphi 0, %s42
      %s64 = sphi 0, %s66
      %s67 = sphi 0, %s64
      %s68 = sphi 0, %s67
      %s84 = sphi 0, %s68
      %s90 = sphi 0, %s92
      %s93 = sphi 0, %s90
      %s94 = sphi 0, %s93
      %s110 = sphi 0, %s94
      %s116 = sphi 0, %s118
      %s119 = sphi 0, %s116
      %s120 = sphi 0, %s119
      %s136 = sphi 0, %s120
      %s142 = sphi 0, %s144
      %s145 = sphi 0, %s142
      %s146 = sphi 0, %s145
      %s162 = sphi 0, %s146
      %s168 = sphi 0, %s170
      %s171 = sphi 0, %s168
      %s172 = sphi 0, %s171
      %s188 = sphi 0, %s172
      %s194 = sphi 0, %s196
      %s197 = sphi 0, %s194
      %s198 = sphi 0, %s197
      %s214 = sphi 0, %s198
    $region4: #{tpu_custom_call.1} parent=1 // loop_header_branch
      %31 = sbr.rel (%p29) target = $region8
    $region5: #{tpu_custom_call.1} parent=1 // loop_body
      %s33 = ssub.s32 %s28, 1
      %s34 = ssub.s32 %s28, 2
      %s35 = sadd.s32 %s28, 1
      %s36 = ssub.s32 %s28, %s35
      %p37 = scmp.eq.s32.totalorder %s36, 0
      %s39 = sadd.s32 %s38, 1
      %s40 = scalar_select %p37, %s38, %s39
      %p43 = pneg %p37
      %p44 = scmp.eq.s32.totalorder %s28, 1
      %p45 = por %p43, %p44
      %p46 = scmp.ne.s32.totalorder %s38, %s41
      %p47 = scmp.eq.s32.totalorder %s28, 0
      %p48 = por %p46, %p47
      %p49 = scmp.ne.s32.totalorder %s38, %s41
      %p50 = scmp.eq.s32.totalorder %s33, 1
      %p51 = por %p49, %p50
      %p52 = scmp.ne.s32.totalorder %s41, %s42
      %p53 = scmp.eq.s32.totalorder %s33, 0
      %p54 = por %p52, %p53
      %p55 = scmp.ne.s32.totalorder %s41, %s42
      %p56 = scmp.eq.s32.totalorder %s34, 1
      %p57 = por %p55, %p56
      %p59 = scmp.ne.s32.totalorder %s42, %s58
      %p60 = scmp.eq.s32.totalorder %s34, 0
      %p61 = por %p59, %p60
      %s62 = ssub.s32 %s28, %s35
      %p63 = scmp.eq.s32.totalorder %s62, 0
      %s65 = sadd.s32 %s64, 1
      %s66 = scalar_select %p63, %s64, %s65
      %p69 = pneg %p63
      %p70 = scmp.eq.s32.totalorder %s28, 1
      %p71 = por %p69, %p70
      %p72 = scmp.ne.s32.totalorder %s64, %s67
      %p73 = scmp.eq.s32.totalorder %s28, 0
      %p74 = por %p72, %p73
      %p75 = scmp.ne.s32.totalorder %s64, %s67
      %p76 = scmp.eq.s32.totalorder %s33, 1
      %p77 = por %p75, %p76
      %p78 = scmp.ne.s32.totalorder %s67, %s68
      %p79 = scmp.eq.s32.totalorder %s33, 0
      %p80 = por %p78, %p79
      %p81 = scmp.ne.s32.totalorder %s67, %s68
      %p82 = scmp.eq.s32.totalorder %s34, 1
      %p83 = por %p81, %p82
      %p85 = scmp.ne.s32.totalorder %s68, %s84
      %p86 = scmp.eq.s32.totalorder %s34, 0
      %p87 = por %p85, %p86
      %s88 = ssub.s32 %s28, %s35
      %p89 = scmp.eq.s32.totalorder %s88, 0
      %s91 = sadd.s32 %s90, 1
      %s92 = scalar_select %p89, %s90, %s91
      %p95 = pneg %p89
      %p96 = scmp.eq.s32.totalorder %s28, 1
      %p97 = por %p95, %p96
      %p98 = scmp.ne.s32.totalorder %s90, %s93
      %p99 = scmp.eq.s32.totalorder %s28, 0
      %p100 = por %p98, %p99
      %p101 = scmp.ne.s32.totalorder %s90, %s93
      %p102 = scmp.eq.s32.totalorder %s33, 1
      %p103 = por %p101, %p102
      %p104 = scmp.ne.s32.totalorder %s93, %s94
      %p105 = scmp.eq.s32.totalorder %s33, 0
      %p106 = por %p104, %p105
      %p107 = scmp.ne.s32.totalorder %s93, %s94
      %p108 = scmp.eq.s32.totalorder %s34, 1
      %p109 = por %p107, %p108
      %p111 = scmp.ne.s32.totalorder %s94, %s110
      %p112 = scmp.eq.s32.totalorder %s34, 0
      %p113 = por %p111, %p112
      %s114 = ssub.s32 %s28, %s35
      %p115 = scmp.eq.s32.totalorder %s114, 0
      %s117 = sadd.s32 %s116, 1
      %s118 = scalar_select %p115, %s116, %s117
      %p121 = pneg %p115
      %p122 = scmp.eq.s32.totalorder %s28, 1
      %p123 = por %p121, %p122
      %p124 = scmp.ne.s32.totalorder %s116, %s119
      %p125 = scmp.eq.s32.totalorder %s28, 0
      %p126 = por %p124, %p125
      %p127 = scmp.ne.s32.totalorder %s116, %s119
      %p128 = scmp.eq.s32.totalorder %s33, 1
      %p129 = por %p127, %p128
      %p130 = scmp.ne.s32.totalorder %s119, %s120
      %p131 = scmp.eq.s32.totalorder %s33, 0
      %p132 = por %p130, %p131
      %p133 = scmp.ne.s32.totalorder %s119, %s120
      %p134 = scmp.eq.s32.totalorder %s34, 1
      %p135 = por %p133, %p134
      %p137 = scmp.ne.s32.totalorder %s120, %s136
      %p138 = scmp.eq.s32.totalorder %s34, 0
      %p139 = por %p137, %p138
      %s140 = ssub.s32 %s28, %s35
      %p141 = scmp.eq.s32.totalorder %s140, 0
      %s143 = sadd.s32 %s142, 1
      %s144 = scalar_select %p141, %s142, %s143
      %p147 = pneg %p141
      %p148 = scmp.eq.s32.totalorder %s28, 1
      %p149 = por %p147, %p148
      %p150 = scmp.ne.s32.totalorder %s142, %s145
      %p151 = scmp.eq.s32.totalorder %s28, 0
      %p152 = por %p150, %p151
      %p153 = scmp.ne.s32.totalorder %s142, %s145
      %p154 = scmp.eq.s32.totalorder %s33, 1
      %p155 = por %p153, %p154
      %p156 = scmp.ne.s32.totalorder %s145, %s146
      %p157 = scmp.eq.s32.totalorder %s33, 0
      %p158 = por %p156, %p157
      %p159 = scmp.ne.s32.totalorder %s145, %s146
      %p160 = scmp.eq.s32.totalorder %s34, 1
      %p161 = por %p159, %p160
      %p163 = scmp.ne.s32.totalorder %s146, %s162
      %p164 = scmp.eq.s32.totalorder %s34, 0
      %p165 = por %p163, %p164
      %s166 = ssub.s32 %s28, %s35
      %p167 = scmp.eq.s32.totalorder %s166, 0
      %s169 = sadd.s32 %s168, 1
      %s170 = scalar_select %p167, %s168, %s169
      %p173 = pneg %p167
      %p174 = scmp.eq.s32.totalorder %s28, 1
      %p175 = por %p173, %p174
      %p176 = scmp.ne.s32.totalorder %s168, %s171
      %p177 = scmp.eq.s32.totalorder %s28, 0
      %p178 = por %p176, %p177
      %p179 = scmp.ne.s32.totalorder %s168, %s171
      %p180 = scmp.eq.s32.totalorder %s33, 1
      %p181 = por %p179, %p180
      %p182 = scmp.ne.s32.totalorder %s171, %s172
      %p183 = scmp.eq.s32.totalorder %s33, 0
      %p184 = por %p182, %p183
      %p185 = scmp.ne.s32.totalorder %s171, %s172
      %p186 = scmp.eq.s32.totalorder %s34, 1
      %p187 = por %p185, %p186
      %p189 = scmp.ne.s32.totalorder %s172, %s188
      %p190 = scmp.eq.s32.totalorder %s34, 0
      %p191 = por %p189, %p190
      %s192 = ssub.s32 %s28, %s35
      %p193 = scmp.eq.s32.totalorder %s192, 0
      %s195 = sadd.s32 %s194, 1
      %s196 = scalar_select %p193, %s194, %s195
      %p199 = pneg %p193
      %p200 = scmp.eq.s32.totalorder %s28, 1
      %p201 = por %p199, %p200
      %p202 = scmp.ne.s32.totalorder %s194, %s197
      %p203 = scmp.eq.s32.totalorder %s28, 0
      %p204 = por %p202, %p203
      %p205 = scmp.ne.s32.totalorder %s194, %s197
      %p206 = scmp.eq.s32.totalorder %s33, 1
      %p207 = por %p205, %p206
      %p208 = scmp.ne.s32.totalorder %s197, %s198
      %p209 = scmp.eq.s32.totalorder %s33, 0
      %p210 = por %p208, %p209
      %p211 = scmp.ne.s32.totalorder %s197, %s198
      %p212 = scmp.eq.s32.totalorder %s34, 1
      %p213 = por %p211, %p212
      %p215 = scmp.ne.s32.totalorder %s198, %s214
      %p216 = scmp.eq.s32.totalorder %s34, 0
      %p217 = por %p215, %p216
      %p218 = scmp.le.s32.totalorder 1, %s28
      %p219 = scmp.lt.s32.totalorder %s28, 3
      %p220 = pnand %p218, %p219
      %p221 = pneg %p220
      // Predicated region
      $region9: #{tpu_custom_call.1} parent=5 // pred_check
        _
      $region10: #{tpu_custom_call.1} parent=5 // pred_check_branch
        %223 = sbr.rel (%p220) target = $region12
      $region11: #{tpu_custom_call.1} parent=5 // pred_region
        %s224 = ssub.s32 %s28, 1
      $region12: #{tpu_custom_call.1} parent=5 // pred_fallthru
        _
      %p225 = scmp.lt.s32.totalorder %s28, 2
      // Predicated region
      $region13: #{tpu_custom_call.1} parent=5 // pred_check
        %p226 = pneg %p225
      $region14: #{tpu_custom_call.1} parent=5 // pred_check_branch
        %228 = sbr.rel (%p226) target = $region16
      $region15: #{tpu_custom_call.1} parent=5 // pred_region
        // Predicated region
        $region17: #{tpu_custom_call.1} parent=15 // pred_check
          %p229 = pneg %p48
        $region18: #{tpu_custom_call.1} parent=15 // pred_check_branch
          %231 = sbr.rel (%p229) target = $region20
        $region19: #{tpu_custom_call.1} parent=15 // pred_region
          %s232 = sand.u32 %s38, 1
          %s233 = scalar_lea.sflag [#allocation3], %s232
          %s234 = sand.u32 %s38, 1
          %s235 = smul.addr %s234, 8
          %s236 = scalar_lea.vmem [#allocation2], %s235
          %s238 = ssub.s32 128, 128
          %239 = vsyncadd %s233, %s238
          %s240 = smul.addr %s28, 128
          %s241 = scalar_lea.hbm %s0, %s240
          %s243 = sshll.u32 %s236, 4
          %s244 = int_to_ptr.vmem [resolvable:$true] %s243
          %246 = dma.hbm_to_vmem [thread:$0]  %s241, 128, %s244, %s233
        $region20: #{tpu_custom_call.1} parent=15 // pred_fallthru
          _
        // Predicated region
        $region21: #{tpu_custom_call.1} parent=15 // pred_check
          %p247 = pneg %p74
        $region22: #{tpu_custom_call.1} parent=15 // pred_check_branch
          %249 = sbr.rel (%p247) target = $region24
        $region23: #{tpu_custom_call.1} parent=15 // pred_region
          %s250 = sand.u32 %s28, 1
          %s251 = scalar_lea.sflag [#allocation6], %s250
          %s252 = sand.u32 %s64, 1
          %s253 = smul.addr %s252, 8
          %s254 = scalar_lea.vmem [#allocation5], %s253
          %s256 = ssub.s32 128, 128
          %257 = vsyncadd %s251, %s256
          %s258 = smul.addr %s28, 128
          %s259 = scalar_lea.hbm %s1, %s258
          %s261 = sshll.u32 %s254, 4
          %s262 = int_to_ptr.vmem [resolvable:$true] %s261
          %264 = dma.hbm_to_vmem [thread:$0]  %s259, 128, %s262, %s251
        $region24: #{tpu_custom_call.1} parent=15 // pred_fallthru
          _
        // Predicated region
        $region25: #{tpu_custom_call.1} parent=15 // pred_check
          %p265 = pneg %p100
        $region26: #{tpu_custom_call.1} parent=15 // pred_check_branch
          %267 = sbr.rel (%p265) target = $region28
        $region27: #{tpu_custom_call.1} parent=15 // pred_region
          %s268 = sand.u32 %s28, 1
          %s269 = scalar_lea.sflag [#allocation6], %s268
          %s270 = sand.u32 %s90, 1
          %s271 = smul.addr %s270, 8
          %s272 = scalar_lea.vmem [#allocation7], %s271
          %s274 = ssub.s32 128, 128
          %275 = vsyncadd %s269, %s274
          %s276 = smul.addr %s28, 128
          %s277 = scalar_lea.hbm %s2, %s276
          %s279 = sshll.u32 %s272, 4
          %s280 = int_to_ptr.vmem [resolvable:$true] %s279
          %282 = dma.hbm_to_vmem [thread:$0]  %s277, 128, %s280, %s269
        $region28: #{tpu_custom_call.1} parent=15 // pred_fallthru
          _
        // Predicated region
        $region29: #{tpu_custom_call.1} parent=15 // pred_check
          %p283 = pneg %p126
        $region30: #{tpu_custom_call.1} parent=15 // pred_check_branch
          %285 = sbr.rel (%p283) target = $region32
        $region31: #{tpu_custom_call.1} parent=15 // pred_region
          %s286 = sand.u32 %s28, 1
          %s287 = scalar_lea.sflag [#allocation9], %s286
          %s288 = sand.u32 %s116, 1
          %s289 = smul.addr %s288, 8
          %s290 = scalar_lea.vmem [#allocation8], %s289
          %s292 = ssub.s32 128, 128
          %293 = vsyncadd %s287, %s292
          %s294 = smul.addr %s28, 128
          %s295 = scalar_lea.hbm %s3, %s294
          %s297 = sshll.u32 %s290, 4
          %s298 = int_to_ptr.vmem [resolvable:$true] %s297
          %300 = dma.hbm_to_vmem [thread:$0]  %s295, 128, %s298, %s287
        $region32: #{tpu_custom_call.1} parent=15 // pred_fallthru
          _
        // Predicated region
        $region33: #{tpu_custom_call.1} parent=15 // pred_check
          %p301 = pneg %p152
        $region34: #{tpu_custom_call.1} parent=15 // pred_check_branch
          %303 = sbr.rel (%p301) target = $region36
        $region35: #{tpu_custom_call.1} parent=15 // pred_region
          %s304 = sand.u32 %s28, 1
          %s305 = scalar_lea.sflag [#allocation9], %s304
          %s306 = sand.u32 %s142, 1
          %s307 = smul.addr %s306, 8
          %s308 = scalar_lea.vmem [#allocation10], %s307
          %s310 = ssub.s32 128, 128
          %311 = vsyncadd %s305, %s310
          %s312 = smul.addr %s28, 128
          %s313 = scalar_lea.hbm %s4, %s312
          %s315 = sshll.u32 %s308, 4
          %s316 = int_to_ptr.vmem [resolvable:$true] %s315
          %318 = dma.hbm_to_vmem [thread:$0]  %s313, 128, %s316, %s305
        $region36: #{tpu_custom_call.1} parent=15 // pred_fallthru
          _
      $region16: #{tpu_custom_call.1} parent=5 // pred_fallthru
        _
      %p319 = scmp.le.s32.totalorder 1, %s28
      %p320 = scmp.lt.s32.totalorder %s28, 3
      %p321 = pnand %p319, %p320
      %p322 = pneg %p321
      // Predicated region
      $region37: #{tpu_custom_call.1} parent=5 // pred_check
        _
      $region38: #{tpu_custom_call.1} parent=5 // pred_check_branch
        %324 = sbr.rel (%p321) target = $region40
      $region39: #{tpu_custom_call.1} parent=5 // pred_region
        %s325 = ssub.s32 %s28, 1
        %s326 = sand.u32 %s41, 1
        %s327 = scalar_lea.sflag [#allocation3], %s326
        %s328 = sand.u32 %s41, 1
        %s329 = smul.addr %s328, 8
        %s330 = scalar_lea.vmem [#allocation2], %s329
        // Predicated region
        $region41: #{tpu_custom_call.1} parent=39 // pred_check
          %p331 = pneg %p54
        $region42: #{tpu_custom_call.1} parent=39 // pred_check_branch
          %333 = sbr.rel (%p331) target = $region44
        $region43: #{tpu_custom_call.1} parent=39 // pred_region
          %334 = dma.done %s327, 128
        $region44: #{tpu_custom_call.1} parent=39 // pred_fallthru
          _
        %s335 = sand.u32 %s33, 1
        %s336 = scalar_lea.sflag [#allocation6], %s335
        %s337 = sand.u32 %s67, 1
        %s338 = smul.addr %s337, 8
        %s339 = scalar_lea.vmem [#allocation5], %s338
        // Predicated region
        $region45: #{tpu_custom_call.1} parent=39 // pred_check
          %p340 = pneg %p80
        $region46: #{tpu_custom_call.1} parent=39 // pred_check_branch
          %342 = sbr.rel (%p340) target = $region48
        $region47: #{tpu_custom_call.1} parent=39 // pred_region
          %343 = dma.done %s336, 128
        $region48: #{tpu_custom_call.1} parent=39 // pred_fallthru
          _
        %s344 = sand.u32 %s33, 1
        %s345 = scalar_lea.sflag [#allocation6], %s344
        %s346 = sand.u32 %s93, 1
        %s347 = smul.addr %s346, 8
        %s348 = scalar_lea.vmem [#allocation7], %s347
        // Predicated region
        $region49: #{tpu_custom_call.1} parent=39 // pred_check
          %p349 = pneg %p106
        $region50: #{tpu_custom_call.1} parent=39 // pred_check_branch
          %351 = sbr.rel (%p349) target = $region52
        $region51: #{tpu_custom_call.1} parent=39 // pred_region
          %352 = dma.done %s345, 128
        $region52: #{tpu_custom_call.1} parent=39 // pred_fallthru
          _
        %s353 = sand.u32 %s33, 1
        %s354 = scalar_lea.sflag [#allocation9], %s353
        %s355 = sand.u32 %s119, 1
        %s356 = smul.addr %s355, 8
        %s357 = scalar_lea.vmem [#allocation8], %s356
        // Predicated region
        $region53: #{tpu_custom_call.1} parent=39 // pred_check
          %p358 = pneg %p132
        $region54: #{tpu_custom_call.1} parent=39 // pred_check_branch
          %360 = sbr.rel (%p358) target = $region56
        $region55: #{tpu_custom_call.1} parent=39 // pred_region
          %361 = dma.done %s354, 128
        $region56: #{tpu_custom_call.1} parent=39 // pred_fallthru
          _
        %s362 = sand.u32 %s33, 1
        %s363 = scalar_lea.sflag [#allocation9], %s362
        %s364 = sand.u32 %s145, 1
        %s365 = smul.addr %s364, 8
        %s366 = scalar_lea.vmem [#allocation10], %s365
        // Predicated region
        $region57: #{tpu_custom_call.1} parent=39 // pred_check
          %p367 = pneg %p158
        $region58: #{tpu_custom_call.1} parent=39 // pred_check_branch
          %369 = sbr.rel (%p367) target = $region60
        $region59: #{tpu_custom_call.1} parent=39 // pred_region
          %370 = dma.done %s363, 128
        $region60: #{tpu_custom_call.1} parent=39 // pred_fallthru
          _
        %s371 = sand.u32 %s41, 1
        %s372 = scalar_lea.sflag [#allocation3], %s371
        %s373 = sand.u32 %s41, 1
        %s374 = smul.addr %s373, 8
        %s375 = scalar_lea.vmem [#allocation2], %s374
        %p376 = pneg %p54
        %p377 = pneg %p51
        %s378 = sand.u32 %s33, 1
        %s379 = scalar_lea.sflag [#allocation6], %s378
        %s380 = sand.u32 %s67, 1
        %s381 = smul.addr %s380, 8
        %s382 = scalar_lea.vmem [#allocation5], %s381
        %p383 = pneg %p80
        %p384 = pneg %p77
        %s385 = sand.u32 %s33, 1
        %s386 = scalar_lea.sflag [#allocation6], %s385
        %s387 = sand.u32 %s93, 1
        %s388 = smul.addr %s387, 8
        %s389 = scalar_lea.vmem [#allocation7], %s388
        %p390 = pneg %p106
        %p391 = pneg %p103
        %s392 = sand.u32 %s33, 1
        %s393 = scalar_lea.sflag [#allocation9], %s392
        %s394 = sand.u32 %s119, 1
        %s395 = smul.addr %s394, 8
        %s396 = scalar_lea.vmem [#allocation8], %s395
        %p397 = pneg %p132
        %p398 = pneg %p129
        %s399 = sand.u32 %s33, 1
        %s400 = scalar_lea.sflag [#allocation9], %s399
        %s401 = sand.u32 %s145, 1
        %s402 = smul.addr %s401, 8
        %s403 = scalar_lea.vmem [#allocation10], %s402
        %p404 = pneg %p158
        %p405 = pneg %p155
        %p406 = pneg %p184
        %p407 = pneg %p181
        %s408 = sand.u32 %s171, 1
        %s409 = scalar_lea.sflag [#allocation4], %s408
        %s410 = sand.u32 %s171, 1
        %s411 = smul.addr %s410, 8
        %s412 = scalar_lea.vmem [#allocation11], %s411
        %p413 = pneg %p210
        %p414 = pneg %p207
        %s415 = sand.u32 %s197, 1
        %s416 = scalar_lea.sflag [#allocation13], %s415
        %s417 = sand.u32 %s197, 1
        %s418 = scalar_lea.vmem [#allocation12], %s417
        %v419 = vld [vmem:[%s330] sm:$0xff]
        %v420 = vld [vmem:[%s339] sm:$0xff]
        %v421 = vmul.f32 %v420, 1.442695
        %v422 = vpow.pop %v421
        %v423 = vld [vmem:[%s366] sm:$0xff]
        %v424 = vmul.f32 %v422, %v423
        %v425 = vadd.f32 %v419, %v424
        %426 = vst [vmem:[%s412] sm:$0xff] %v425
        %v427 = vld [vmem:[%s348] sm:$0xff]
        %v428 = vld [vmem:[%s357] sm:$0xff]
        %v429 = vrcp.pop %v428
        %v430 = vmul.f32 1.0, %v429
        %v431 = vmul.f32 %v422, %v430
        %v432 = vmul.f32 %v431, %v431
        %v433 = vsub.f32 %v419, %v427
        %v434 = vmul.f32 %v433, %v430
        %v435 = vmul.f32 %v434, %v434
        %v436 = vadd.f32 %v432, %v435
        %v437 = vsub.f32 %v436, 1.0
        %v438 = vmul.f32 %v437, 0.5
        %v439 = vlog2.pop %v428
        %v440 = vmul.f32 %v439, 0.6931472
        %v441 = vsub.f32 %v420, %v440
        %v442 = vsub.f32 %v438, %v441
        %v443 = vrot.slane %v442, 4
        %v444 = vadd.f32 %v442, %v443
        %v445 = vrot.slane %v444, 2
        %v446 = vadd.f32 %v444, %v445
        %v447 = vrot.slane %v446, 1
        %v448 = vadd.f32 %v446, %v447
        %449 = vst [vmem:[%s418] sm:$0x1] %v448
        %s450 = sand.u32 %s171, 1
        %s451 = scalar_lea.sflag [#allocation4], %s450
        %s452 = sand.u32 %s171, 1
        %s453 = smul.addr %s452, 8
        %s454 = scalar_lea.vmem [#allocation11], %s453
        %s455 = sand.u32 %s197, 1
        %s456 = scalar_lea.sflag [#allocation13], %s455
        %s457 = sand.u32 %s197, 1
        %s458 = scalar_lea.vmem [#allocation12], %s457
        // Predicated region
        $region61: #{tpu_custom_call.1} parent=39 // pred_check
          %p459 = pneg %p181
        $region62: #{tpu_custom_call.1} parent=39 // pred_check_branch
          %461 = sbr.rel (%p459) target = $region64
        $region63: #{tpu_custom_call.1} parent=39 // pred_region
          %s463 = ssub.s32 128, 128
          %464 = vsyncadd %s451, %s463
          %s465 = smul.addr %s33, 128
          %s466 = scalar_lea.hbm %s5, %s465
          %s468 = sshll.u32 %s454, 4
          %s469 = int_to_ptr.vmem [resolvable:$true] %s468
          %471 = dma.vmem_to_hbm [thread:$0]  %s469, 128, %s466, %s451
        $region64: #{tpu_custom_call.1} parent=39 // pred_fallthru
          _
        // Predicated region
        $region65: #{tpu_custom_call.1} parent=39 // pred_check
          %p472 = pneg %p207
        $region66: #{tpu_custom_call.1} parent=39 // pred_check_branch
          %474 = sbr.rel (%p472) target = $region68
        $region67: #{tpu_custom_call.1} parent=39 // pred_region
          %s476 = ssub.s32 16, 16
          %477 = vsyncadd %s456, %s476
          %s478 = smul.addr %s33, 16
          %s479 = scalar_lea.hbm %s6, %s478
          %s481 = sshll.u32 %s458, 4
          %s482 = int_to_ptr.vmem [resolvable:$true] %s481
          %484 = dma.vmem_to_hbm [thread:$0]  %s482, 16, %s479, %s456
        $region68: #{tpu_custom_call.1} parent=39 // pred_fallthru
          _
      $region40: #{tpu_custom_call.1} parent=5 // pred_fallthru
        _
      %p485 = scmp.le.s32.totalorder 2, %s28
      // Predicated region
      $region69: #{tpu_custom_call.1} parent=5 // pred_check
        %p486 = pneg %p485
      $region70: #{tpu_custom_call.1} parent=5 // pred_check_branch
        %488 = sbr.rel (%p486) target = $region72
      $region71: #{tpu_custom_call.1} parent=5 // pred_region
        %s489 = ssub.s32 %s28, 2
        // Predicated region
        $region73: #{tpu_custom_call.1} parent=71 // pred_check
          %p490 = pneg %p187
        $region74: #{tpu_custom_call.1} parent=71 // pred_check_branch
          %492 = sbr.rel (%p490) target = $region76
        $region75: #{tpu_custom_call.1} parent=71 // pred_region
          %s493 = sand.u32 %s172, 1
          %s494 = scalar_lea.sflag [#allocation4], %s493
          %s495 = sand.u32 %s172, 1
          %s496 = smul.addr %s495, 8
          %s497 = scalar_lea.vmem [#allocation11], %s496
          %498 = dma.done %s494, 128
        $region76: #{tpu_custom_call.1} parent=71 // pred_fallthru
          _
        // Predicated region
        $region77: #{tpu_custom_call.1} parent=71 // pred_check
          %p499 = pneg %p213
        $region78: #{tpu_custom_call.1} parent=71 // pred_check_branch
          %501 = sbr.rel (%p499) target = $region80
        $region79: #{tpu_custom_call.1} parent=71 // pred_region
          %s502 = sand.u32 %s198, 1
          %s503 = scalar_lea.sflag [#allocation13], %s502
          %s504 = sand.u32 %s198, 1
          %s505 = scalar_lea.vmem [#allocation12], %s504
          %506 = dma.done %s503, 16
        $region80: #{tpu_custom_call.1} parent=71 // pred_fallthru
          _
      $region72: #{tpu_custom_call.1} parent=5 // pred_fallthru
        _
    $region6: #{tpu_custom_call.1} parent=1 // loop_footer
      %s32 = sadd.s32 1, %s28
    $region7: #{tpu_custom_call.1} parent=1 // loop_footer_branch
      %27 = sbr.rel target = $region3
    $region8: #{tpu_custom_call.1} parent=1 // loop_exit
      _
    %507 = vsyncpa [#allocation3], 1
    %s508 = scalar_lea.sflag [#allocation3], 1
    %509 = vsyncpa %s508, 1
    %510 = vsyncpa [#allocation6], 1
    %s511 = scalar_lea.sflag [#allocation6], 1
    %512 = vsyncpa %s511, 1
    %513 = vsyncpa [#allocation9], 1
    %s514 = scalar_lea.sflag [#allocation9], 1
    %515 = vsyncpa %s514, 1
    %516 = vsyncpa [#allocation4], 1
    %s517 = scalar_lea.sflag [#allocation4], 1
    %518 = vsyncpa %s517, 1
    %519 = vsyncpa [#allocation13], 1
    %s520 = scalar_lea.sflag [#allocation13], 1
    %521 = vsyncpa %s520, 1

</llo_original>
